<compile_context>
chip_gen: v7x
topology: tpu7x:2x2x1
jax: 0.10.0
libtpu: 0.0.40
codegen_flags: <defaults>
</compile_context>

<pallas_src>
import functools

import jax
import jax.numpy as jnp
from jax import lax
from jax.experimental import pallas as pl
from jax.experimental.pallas import tpu as pltpu


# ----------------------------------------------------------------------------
# Generation-aware VMEM budget and tile defaults
# ----------------------------------------------------------------------------
def _vmem_capacity_bytes():
    try:
        info = pltpu.get_tpu_info()
        return int(getattr(info, "vmem_capacity_bytes", 64 * 1024 * 1024))
    except Exception:
        return 64 * 1024 * 1024  # conservative fallback (v7x-sized)


_VMEM_CAP = _vmem_capacity_bytes()
_VMEM_LIMIT = int(_VMEM_CAP * 0.75)
_SMALL_VMEM = _VMEM_CAP <= 64 * 1024 * 1024          # v7x
_DEFAULT_TQ = 128 if _SMALL_VMEM else 256             # attention query-row tile
_DEFAULT_TM = 256 if _SMALL_VMEM else 512              # projection row tile


def _block_spec(shape, index_map, *, buffers=None):
    """BlockSpec with optional buffer-count override (falls back if unsupported)."""
    if buffers is not None:
        try:
            return pl.BlockSpec(shape, index_map, pipeline_mode=pl.Buffered(buffers))
        except Exception:
            pass
    return pl.BlockSpec(shape, index_map)


# ----------------------------------------------------------------------------
# Kernel 1: row-tiled linear projection  y = x @ W + b   (W stored as [in, out], bf16)
# ----------------------------------------------------------------------------
def _linear_kernel(x_ref, w_ref, b_ref, o_ref):
    acc = jnp.dot(x_ref[...], w_ref[...], preferred_element_type=jnp.float32)
    o_ref[...] = (acc + b_ref[...].astype(jnp.float32)).astype(o_ref.dtype)


def linear(x2d, w_t, b, *, tm=None):
    """x2d: [N, Din] (bf16), w_t: [Din, Dout] (bf16), b: [Dout] (f32)."""
    N, Din = x2d.shape
    Dout = w_t.shape[1]
    tm = min(tm or _DEFAULT_TM, N)
    return pl.pallas_call(
        _linear_kernel,
        out_shape=jax.ShapeDtypeStruct((N, Dout), x2d.dtype),
        grid=(pl.cdiv(N, tm),),
        in_specs=[
            pl.BlockSpec((tm, Din), lambda i: (i, 0)),
            # weight/bias never change across the grid -> single-buffered VMEM residents
            _block_spec((Din, Dout), lambda i: (0, 0), buffers=1),
            _block_spec((1, Dout), lambda i: (0, 0), buffers=1),
        ],
        out_specs=pl.BlockSpec((tm, Dout), lambda i: (i, 0)),
        compiler_params=pltpu.CompilerParams(
            dimension_semantics=("parallel",),
            vmem_limit_bytes=_VMEM_LIMIT,
        ),
    )(x2d, w_t, b.reshape(1, Dout))


# ----------------------------------------------------------------------------
# Kernel 2: fused Q/K/V projection for self-attention (reads X from HBM once)
# ----------------------------------------------------------------------------
def _qkv_kernel(x_ref, w_ref, b_ref, q_ref, k_ref, v_ref):
    D = q_ref.shape[-1]
    y = jnp.dot(x_ref[...], w_ref[...], preferred_element_type=jnp.float32)
    y = y + b_ref[...].astype(jnp.float32)
    q_ref[...] = y[:, 0 * D:1 * D].astype(q_ref.dtype)
    k_ref[...] = y[:, 1 * D:2 * D].astype(k_ref.dtype)
    v_ref[...] = y[:, 2 * D:3 * D].astype(v_ref.dtype)


def fused_qkv_projection(x2d, w_qkv, b_qkv, *, tm=None):
    """x2d: [N, D] (bf16), w_qkv: [D, 3D] (bf16), b_qkv: [3D] (f32) -> (q, k, v)."""
    N, Din = x2d.shape
    D = w_qkv.shape[1] // 3
    tm = min(tm or _DEFAULT_TM, N)
    out_sds = jax.ShapeDtypeStruct((N, D), x2d.dtype)
    return pl.pallas_call(
        _qkv_kernel,
        out_shape=(out_sds, out_sds, out_sds),
        grid=(pl.cdiv(N, tm),),
        in_specs=[
            pl.BlockSpec((tm, Din), lambda i: (i, 0)),
            _block_spec((Din, 3 * D), lambda i: (0, 0), buffers=1),
            _block_spec((1, 3 * D), lambda i: (0, 0), buffers=1),
        ],
        out_specs=(
            pl.BlockSpec((tm, D), lambda i: (i, 0)),
            pl.BlockSpec((tm, D), lambda i: (i, 0)),
            pl.BlockSpec((tm, D), lambda i: (i, 0)),
        ),
        compiler_params=pltpu.CompilerParams(
            dimension_semantics=("parallel",),
            vmem_limit_bytes=_VMEM_LIMIT,
        ),
    )(x2d, w_qkv, b_qkv.reshape(1, 3 * D))


# ----------------------------------------------------------------------------
# Kernel 3: q-row-tiled multi-head attention with fused output (dense) projection
# ----------------------------------------------------------------------------
def _attn_kernel(*refs, num_heads, depth, has_mask, mask_heads, return_attn):
    it = iter(refs)
    q_ref, k_ref, v_ref = next(it), next(it), next(it)
    m_ref = next(it) if has_mask else None
    dw_ref, db_ref = next(it), next(it)
    o_ref = next(it)
    a_ref = next(it) if return_attn else None
    acc_ref = next(it)  # f32 [TQ, D] scratch — fused dense accumulator

    q_all = q_ref[0]          # [TQ, D] bf16; 1/sqrt(depth) already folded into Wq
    k_all = k_ref[0]          # [Sk, D] bf16
    v_all = v_ref[0]          # [Sk, D] bf16

    # Initialize the fused output-projection accumulator with the dense bias.
    acc_ref[...] = jnp.broadcast_to(db_ref[...].astype(jnp.float32), acc_ref.shape)

    neg = jnp.float32(-1e9)
    shared_bias = None
    if has_mask and mask_heads == 1:
        # Head-shared mask bias computed once per block (deduplicated across heads).
        shared_bias = m_ref[0, 0].astype(jnp.float32) * neg

    for h in range(num_heads):        # static unroll; all slices are static
        lo = h * depth
        q_h = q_all[:, lo:lo + depth]
        k_h = k_all[:, lo:lo + depth]
        v_h = v_all[:, lo:lo + depth]

        # QK^T: contract the depth axis directly (no k.T materialization).
        logits = lax.dot_general(q_h, k_h, (((1,), (1,)), ((), ())),
                                 preferred_element_type=jnp.float32)
        if has_mask:
            bias = shared_bias if mask_heads == 1 else (
                m_ref[0, h].astype(jnp.float32) * neg)
            logits = logits + bias

        # Row-max subtraction bounds exp() even for padded query rows.
        logits = logits - jnp.max(logits, axis=-1, keepdims=True)
        e = jnp.exp(logits)
        # approx reciprocal runs on the EUP (free slot); rows sum to 1 within ~1e-3.
        p = e * pl.reciprocal(jnp.sum(e, axis=-1, keepdims=True), approx=True)
        if return_attn:
            a_ref[0, h] = p.astype(a_ref.dtype)

        out_h = jnp.dot(p.astype(v_h.dtype), v_h, preferred_element_type=jnp.float32)
        # Fused dense projection: out_h @ dense_w[lo:lo+depth, :] accumulated in f32.
        acc_ref[...] += jnp.dot(out_h.astype(dw_ref.dtype), dw_ref[lo:lo + depth, :],
                                preferred_element_type=jnp.float32)

    # Single lane-dense store of the fully projected [TQ, D] output block.
    o_ref[0] = acc_ref[...].astype(o_ref.dtype)


def multi_head_attention(q, k, v, mask, dense_w, dense_b, *, num_heads,
                         out_dtype=None, attn_dtype=None, return_attn=True, tq=None):
    """q: [B, Sq, D], k/v: [B, Sk, D] (bf16). Returns (dense(attn_out) [B,Sq,D], attn)."""
    B, Sq, D = q.shape
    Sk = k.shape[1]
    depth = D // num_heads
    out_dtype = out_dtype or q.dtype
    attn_dtype = attn_dtype or out_dtype
    tq = min(tq or _DEFAULT_TQ, Sq)
    n_q = pl.cdiv(Sq, tq)

    in_specs = [
        pl.BlockSpec((1, tq, D), lambda b, qi: (b, qi, 0)),
        # K/V only change at batch boundaries -> single-buffered (VMEM headroom on v7x)
        _block_spec((1, Sk, D), lambda b, qi: (b, 0, 0), buffers=1),
        _block_spec((1, Sk, D), lambda b, qi: (b, 0, 0), buffers=1),
    ]
    args = [q, k, v]

    has_mask = mask is not None
    mask_heads = 1
    if has_mask:
        m = jnp.asarray(mask)
        if m.ndim > 4:
            raise ValueError(f"mask rank must be <= 4, got {m.ndim}")
        m = m.reshape((1,) * (4 - m.ndim) + m.shape)
        mb, mh, ms, mk = m.shape
        if (mb not in (1, B) or mh not in (1, num_heads)
                or ms not in (1, Sq) or mk not in (1, Sk)):
            raise ValueError(
                f"mask shape {m.shape} is not broadcast-compatible with "
                f"logits shape {(B, num_heads, Sq, Sk)}")
        if mk == 1:
            m = jnp.broadcast_to(m, (mb, mh, ms, Sk))
        # Keep the mask at its natural broadcast shape (no HBM materialized broadcast);
        # pass it as bf16 and do the *(-1e9) in-kernel.
        m = m.astype(jnp.bfloat16)
        mask_heads = mh
        ms_blk = tq if ms == Sq else 1

        def m_imap(b, qi):
            return (b if mb == B else 0, 0, qi if ms == Sq else 0, 0)

        in_specs.append(pl.BlockSpec((1, mask_heads, ms_blk, Sk), m_imap))
        args.append(m)

    # Fused output-projection weight/bias: VMEM-resident, single-buffered.
    in_specs.append(_block_spec((D, D), lambda b, qi: (0, 0), buffers=1))
    in_specs.append(_block_spec((1, D), lambda b, qi: (0, 0), buffers=1))
    args.append(dense_w)
    args.append(dense_b.reshape(1, D))

    out_shapes = [jax.ShapeDtypeStruct((B, Sq, D), out_dtype)]
    out_specs = [pl.BlockSpec((1, tq, D), lambda b, qi: (b, qi, 0))]
    if return_attn:
        out_shapes.append(jax.ShapeDtypeStruct((B, num_heads, Sq, Sk), attn_dtype))
        out_specs.append(pl.BlockSpec((1, num_heads, tq, Sk),
                                      lambda b, qi: (b, 0, qi, 0)))

    kernel = functools.partial(
        _attn_kernel, num_heads=num_heads, depth=depth,
        has_mask=has_mask, mask_heads=mask_heads, return_attn=return_attn)

    outs = pl.pallas_call(
        kernel,
        out_shape=tuple(out_shapes),
        grid=(B, n_q),
        in_specs=in_specs,
        out_specs=tuple(out_specs),
        scratch_shapes=[pltpu.VMEM((tq, D), jnp.float32)],
        compiler_params=pltpu.CompilerParams(
            dimension_semantics=("parallel", "parallel"),
            vmem_limit_bytes=_VMEM_LIMIT,
        ),
    )(*args)
    if return_attn:
        return outs[0], outs[1]
    return outs[0], None


# ----------------------------------------------------------------------------
# Module-equivalent wrapper
# ----------------------------------------------------------------------------
class MultiHeadAttentionPallas:
    def __init__(self, model_dim, num_heads, key, *,
                 param_dtype=jnp.bfloat16, compute_dtype=jnp.bfloat16):
        assert model_dim % num_heads == 0
        self.model_dim = model_dim
        self.num_heads = num_heads
        self.depth = model_dim // num_heads
        self.compute_dtype = compute_dtype
        ks = jax.random.split(key, 8)
        s = 0.1
        # f32 master init, then weights cast once to bf16 ([in, out] layout).
        wq = jax.random.normal(ks[0], (model_dim, model_dim), jnp.float32) * s
        bq = jax.random.normal(ks[1], (model_dim,), jnp.float32) * s
        wk = jax.random.normal(ks[2], (model_dim, model_dim), jnp.float32) * s
        bk = jax.random.normal(ks[3], (model_dim,), jnp.float32) * s
        wv = jax.random.normal(ks[4], (model_dim, model_dim), jnp.float32) * s
        bv = jax.random.normal(ks[5], (model_dim,), jnp.float32) * s
        wd = jax.random.normal(ks[6], (model_dim, model_dim), jnp.float32) * s
        bd = jax.random.normal(ks[7], (model_dim,), jnp.float32) * s

        self.wq_w, self.wq_b = wq.astype(param_dtype), bq
        self.wk_w, self.wk_b = wk.astype(param_dtype), bk
        self.wv_w, self.wv_b = wv.astype(param_dtype), bv
        self.dense_w, self.dense_b = wd.astype(param_dtype), bd

        # 1/sqrt(depth) folded into the Q projection (zero-cost logit scaling).
        scale = 1.0 / (self.depth ** 0.5)
        self.wq_w_scaled = (wq * scale).astype(param_dtype)
        self.wq_b_scaled = (bq * scale).astype(jnp.float32)

        # Pre-concatenated fused QKV weight/bias for the self-attention fast path.
        self.wqkv_w = jnp.concatenate([self.wq_w_scaled, self.wk_w, self.wv_w], axis=1)
        self.wqkv_b = jnp.concatenate([self.wq_b_scaled, self.wk_b, self.wv_b], axis=0)

    def __call__(self, Q, K, V, mask=None, return_attention_weights=True):
        out_dtype = Q.dtype
        B, Sq, D = Q.shape
        Sk = K.shape[1]
        cd = self.compute_dtype

        if Q is K and K is V:
            # self-attention: one fused GEMM, X read from HBM once
            q, k, v = fused_qkv_projection(Q.reshape(B * Sq, D).astype(cd),
                                           self.wqkv_w, self.wqkv_b)
        else:
            q = linear(Q.reshape(B * Sq, D).astype(cd), self.wq_w_scaled, self.wq_b_scaled)
            k = linear(K.reshape(B * Sk, D).astype(cd), self.wk_w, self.wk_b)
            v = linear(V.reshape(B * Sk, D).astype(cd), self.wv_w, self.wv_b)
        q = q.reshape(B, Sq, D)
        k = k.reshape(B, Sk, D)
        v = v.reshape(B, Sk, D)

        # Head split/merge AND the final dense projection happen inside the kernel.
        out, attn = multi_head_attention(
            q, k, v, mask, self.dense_w, self.dense_b,
            num_heads=self.num_heads, out_dtype=out_dtype,
            return_attn=return_attention_weights)
        return out, attn


# ----------------------------------------------------------------------------
# Pure-JAX reference (f32 math on the same bf16 parameters) for a sanity check
# ----------------------------------------------------------------------------
def reference(mha, Q, K, V, mask=None):
    f32 = jnp.float32
    B, Sq, D = Q.shape
    H, depth = mha.num_heads, mha.depth
    q = Q @ mha.wq_w.astype(f32) + mha.wq_b
    k = K @ mha.wk_w.astype(f32) + mha.wk_b
    v = V @ mha.wv_w.astype(f32) + mha.wv_b

    def split(x):
        return jnp.transpose(x.reshape(B, -1, H, depth), (0, 2, 1, 3))

    q, k, v = split(q), split(k), split(v)
    logits = jnp.einsum("bhqd,bhkd->bhqk", q, k) / (depth ** 0.5)
    if mask is not None:
        m = jnp.asarray(mask, f32)
        m = m.reshape((1,) * (4 - m.ndim) + m.shape)
        logits = logits + m * (-1e9)
    attn = jax.nn.softmax(logits, axis=-1)
    out = jnp.einsum("bhqk,bhkd->bhqd", attn, v)
    out = jnp.transpose(out, (0, 2, 1, 3)).reshape(B, Sq, D)
    out = out @ mha.dense_w.astype(f32) + mha.dense_b
    return out, attn


if __name__ == "__main__":
    key = jax.random.PRNGKey(0)
    k_param, k_q, k_k, k_v, k_x = jax.random.split(key, 5)

    batch, seq, model_dim, num_heads = 2, 8, 32, 4
    Q = jax.random.normal(k_q, (batch, seq, model_dim), jnp.float32)
    K = jax.random.normal(k_k, (batch, seq, model_dim), jnp.float32)
    V = jax.random.normal(k_v, (batch, seq, model_dim), jnp.float32)
    X = jax.random.normal(k_x, (batch, seq, model_dim), jnp.float32)

    mha = MultiHeadAttentionPallas(model_dim, num_heads, k_param)
    TOL = dict(atol=2e-2, rtol=2e-2)  # bf16 compute path vs f32 reference

    # 1) cross-attention path (distinct Q/K/V), no mask (no mask block at all)
    out, attn = mha(Q, K, V, mask=None)
    out = jax.block_until_ready(out)
    attn = jax.block_until_ready(attn)
    ref_out, ref_attn = reference(mha, Q, K, V, mask=None)
    assert out.shape == (batch, seq, model_dim)
    assert attn.shape == (batch, num_heads, seq, seq)
    assert jnp.allclose(out, ref_out, **TOL), float(jnp.max(jnp.abs(out - ref_out)))
    assert jnp.allclose(attn, ref_attn, **TOL), float(jnp.max(jnp.abs(attn - ref_attn)))

    # 2) self-attention path (fused QKV GEMM) with a head-shared padding mask
    mask = jnp.zeros((batch, 1, seq, seq), jnp.float32).at[:, :, :, -2:].set(1.0)
    out2, attn2 = mha(X, X, X, mask=mask)
    out2 = jax.block_until_ready(out2)
    attn2 = jax.block_until_ready(attn2)
    ref_out2, ref_attn2 = reference(mha, X, X, X, mask=mask)
    assert jnp.allclose(out2, ref_out2, **TOL), float(jnp.max(jnp.abs(out2 - ref_out2)))
    assert jnp.allclose(attn2, ref_attn2, **TOL), float(jnp.max(jnp.abs(attn2 - ref_attn2)))

    # 3) output-only variant: skips the O(B*H*Sq*Sk) attention-weights writeback
    out3, attn3 = mha(X, X, X, mask=mask, return_attention_weights=False)
    out3 = jax.block_until_ready(out3)
    assert attn3 is None
    assert jnp.allclose(out3, ref_out2, **TOL), float(jnp.max(jnp.abs(out3 - ref_out2)))

    print("KERNEL_OK")
</pallas_src>

<mosaic_0001>
module attributes {stable_mosaic.version = 11 : i64} {
  func.func @_linear_kernel(%arg0: i32, %arg1: memref<16x32xbf16, #tpu.memory_space<vmem>>, %arg2: memref<32x32xbf16, #tpu.memory_space<vmem>>, %arg3: memref<1x32xf32, #tpu.memory_space<vmem>>, %arg4: memref<16x32xbf16, #tpu.memory_space<vmem>>) attributes {dimension_semantics = [#tpu.dimension_semantics<parallel>], iteration_bounds = array<i64: 1>, scalar_prefetch = 0 : i64, scratch_operands = 0 : i64, tpu.core_type = #tpu.core_type<tc>, window_params = [{transform_indices = @transform_0, window_bounds = array<i64: 16, 32>}, {pipeline_mode = #tpu.pipeline_mode<synchronous>, transform_indices = @transform_1, window_bounds = array<i64: 32, 32>}, {pipeline_mode = #tpu.pipeline_mode<synchronous>, transform_indices = @transform_2, window_bounds = array<i64: 1, 32>}, {transform_indices = @transform_3, window_bounds = array<i64: 16, 32>}]} {
    %c0 = arith.constant 0 : index
    %c0_0 = arith.constant 0 : index
    %0 = vector.load %arg1[%c0, %c0_0] : memref<16x32xbf16, #tpu.memory_space<vmem>>, vector<16x32xbf16>
    %c0_1 = arith.constant 0 : index
    %c0_2 = arith.constant 0 : index
    %1 = vector.load %arg2[%c0_1, %c0_2] : memref<32x32xbf16, #tpu.memory_space<vmem>>, vector<32x32xbf16>
    %cst = arith.constant dense<0.000000e+00> : vector<16x32xf32>
    %2 = tpu.matmul %0, %1, %cst {dimension_numbers = #tpu.dot_dimension_numbers<[1], [0], [0], [1], [0, 0, 1, 1], [], []>} : vector<16x32xbf16>, vector<32x32xbf16>, vector<16x32xf32> -> vector<16x32xf32>
    %c0_3 = arith.constant 0 : index
    %c0_4 = arith.constant 0 : index
    %3 = vector.load %arg3[%c0_3, %c0_4] : memref<1x32xf32, #tpu.memory_space<vmem>>, vector<1x32xf32>
    %4 = vector.broadcast %3 : vector<1x32xf32> to vector<16x32xf32>
    %5 = arith.addf %2, %4 : vector<16x32xf32>
    %6 = arith.truncf %5 : vector<16x32xf32> to vector<16x32xbf16>
    %c0_5 = arith.constant 0 : index
    %c0_6 = arith.constant 0 : index
    %7 = vector.load %arg4[%c0_5, %c0_6] : memref<16x32xbf16, #tpu.memory_space<vmem>>, vector<16x32xbf16>
    tpu.vector_store %arg4[%c0_5, %c0_6], %6 {strides = array<i32>} : memref<16x32xbf16, #tpu.memory_space<vmem>>, vector<16x32xbf16>,
    return
  }
  func.func @transform_0(%arg0: i32) -> (i32, i32) {
    %c0_i32 = arith.constant 0 : i32
    %c0_i32_0 = arith.constant 0 : i32
    return %arg0, %c0_i32 : i32, i32
  }
  func.func @transform_1(%arg0: i32) -> (i32, i32) {
    %c0_i32 = arith.constant 0 : i32
    %c0_i32_0 = arith.constant 0 : i32
    %c0_i32_1 = arith.constant 0 : i32
    return %c0_i32, %c0_i32_0 : i32, i32
  }
  func.func @transform_2(%arg0: i32) -> (i32, i32) {
    %c0_i32 = arith.constant 0 : i32
    %c0_i32_0 = arith.constant 0 : i32
    %c0_i32_1 = arith.constant 0 : i32
    return %c0_i32, %c0_i32_0 : i32, i32
  }
  func.func @transform_3(%arg0: i32) -> (i32, i32) {
    %c0_i32 = arith.constant 0 : i32
    %c0_i32_0 = arith.constant 0 : i32
    return %arg0, %c0_i32 : i32, i32
  }
}

</mosaic_0001>

<llo_original>
// kernel: tpu_custom_call.1
$region0: #{tpu_custom_call.1}
  #allocation0 [shape = 'u32[]', space=smem, size = 0x4, offset = 0x4, fixed_abs, tag = 'smem constant byte address 0x4 - core index']
  #allocation1 [shape = 'u32[144,128]{1,0:T(1,128)}', space=vmem, size = 0x12000, scoped, tag = 'internal scratch']
  %s0 = inlined_call_operand.hbm [shape: bf16[16,32], index: 0, kind: input, shape index: {}]
  %s1 = inlined_call_operand.hbm [shape: bf16[32,32], index: 1, kind: input, shape index: {}]
  %s2 = inlined_call_operand.vmem [shape: f32[1,32], index: 2, kind: input, shape index: {}]
  %s3 = inlined_call_operand.hbm [shape: bf16[16,32], index: 3, kind: output, shape index: {}]
  %s4 = sld [smem:[#allocation0]]
  $region30: #{tpu_custom_call.1} parent=0
    _
  %s6 = ssub.s32 1, %s4
  %s7 = scalar_select 0, %s6, %s4
  $region1: #{tpu_custom_call.1} parent=0
    #allocation2 [shape = 'u8[4096]{0}', space=vmem, size = 0x1000, scoped, tag = 'input window, operand 0, single buffered']
    #allocation3 [shape = 's32[1]{0}', space=sflag, size = 0x4, scoped, tag = 'scoped memory for tpu_custom_call.1']
    #allocation4 [shape = 's32[1]{0}', space=sflag, size = 0x4, scoped, tag = 'scoped memory for tpu_custom_call.1']
    #allocation5 [shape = 'u8[8192]{0}', space=vmem, size = 0x2000, scoped, tag = 'input window, operand 1, single buffered']
    #allocation6 [shape = 's32[1]{0}', space=sflag, size = 0x4, scoped, tag = 'scoped memory for tpu_custom_call.1']
    #allocation7 [shape = 'u8[4096]{0}', space=vmem, size = 0x1000, scoped, tag = 'output window, operand 0, single buffered']
    %8 = vsyncpa [#allocation3], 0
    %9 = vsyncpa [#allocation6], 0
    %10 = vsyncpa [#allocation4], 0
    // Predicated region
    $region2: #{tpu_custom_call.1} parent=1 // pred_check
      _
    $region3: #{tpu_custom_call.1} parent=1 // pred_check_branch
      %12 = sbr.rel (0) target = $region5
    $region4: #{tpu_custom_call.1} parent=1 // pred_region
      %s14 = ssub.s32 128, 128
      %15 = vsyncadd [#allocation3], %s14
      %s16 = sshll.u32 [#allocation2], 4
      %s17 = int_to_ptr.vmem [resolvable:$true] %s16
      %22 = dma.hbm_to_vmem [thread:$0]  %s0, 128, %s17, [#allocation3], 64, 64, 4
    $region5: #{tpu_custom_call.1} parent=1 // pred_fallthru
      _
    // Predicated region
    $region6: #{tpu_custom_call.1} parent=1 // pred_check
      _
    $region7: #{tpu_custom_call.1} parent=1 // pred_check_branch
      %24 = sbr.rel (0) target = $region9
    $region8: #{tpu_custom_call.1} parent=1 // pred_region
      %s26 = ssub.s32 256, 256
      %27 = vsyncadd [#allocation6], %s26
      %s28 = sshll.u32 [#allocation5], 4
      %s29 = int_to_ptr.vmem [resolvable:$true] %s28
      %34 = dma.hbm_to_vmem [thread:$0]  %s1, 256, %s29, [#allocation6], 64, 64, 4
    $region9: #{tpu_custom_call.1} parent=1 // pred_fallthru
      _
    // Predicated region
    $region10: #{tpu_custom_call.1} parent=1 // pred_check
      _
    $region11: #{tpu_custom_call.1} parent=1 // pred_check_branch
      %36 = sbr.rel (0) target = $region13
    $region12: #{tpu_custom_call.1} parent=1 // pred_region
      _
    $region13: #{tpu_custom_call.1} parent=1 // pred_fallthru
      _
    // Predicated region
    $region14: #{tpu_custom_call.1} parent=1 // pred_check
      _
    $region15: #{tpu_custom_call.1} parent=1 // pred_check_branch
      %38 = sbr.rel (0) target = $region17
    $region16: #{tpu_custom_call.1} parent=1 // pred_region
      %39 = dma.done [#allocation3], 128
    $region17: #{tpu_custom_call.1} parent=1 // pred_fallthru
      _
    // Predicated region
    $region18: #{tpu_custom_call.1} parent=1 // pred_check
      _
    $region19: #{tpu_custom_call.1} parent=1 // pred_check_branch
      %41 = sbr.rel (0) target = $region21
    $region20: #{tpu_custom_call.1} parent=1 // pred_region
      %42 = dma.done [#allocation6], 256
    $region21: #{tpu_custom_call.1} parent=1 // pred_fallthru
      _
    %v44 = vld [vmem:[#allocation2] sm:$0xf]
    %v45 = vld [vmem:[#allocation2 + $0x4] sm:$0xf]
    %v46 = vld [vmem:[#allocation5] sm:$0xf]
    %v47 = vld [vmem:[#allocation5 + $0x4] sm:$0xf]
    %v48 = vld [vmem:[#allocation5 + $0x8] sm:$0xf]
    %v49 = vld [vmem:[#allocation5 + $0xc] sm:$0xf]
    %v50 = vld [vmem:[%s2] sm:$0x1]
    %v52 = vlaneseq
    %v53 = vshrl.u32 %v52, 7
    %v54 = vsub.s32 0, %v53
    %v55 = vrot.slane %v50, %v54
    %v59 = vunpack.c.l.b16 %v44
    %v60 = vunpack.c.l.b16 %v45
    %v61 = vpack.c.b16 %v60, %v59
    %v66 = vunpack.c.l.b16 %v46
    %v67 = vunpack.c.l.b16 %v47
    %v68 = vunpack.c.l.b16 %v48
    %v69 = vunpack.c.l.b16 %v49
    %v70 = vpack.c.b16 %v67, %v66
    %v71 = vpack.c.b16 %v69, %v68
    %vm74 = vcmask 261120
    %v76 = vsel %vm74, %v61, 0
    %78 = vmatprep.subr.bf16.mxu0 0
    %79 = vmatpush1.bf16.msra.mxu0 %v70
    %80 = vmatprep.subr.bf16.mxu0 0
    %81 = vmatpush1.bf16.msra.mxu0 %v71
    %82 = vmatprep.subr.bf16.mxu0 0
    %83 = vmatpush1.bf16.msra.mxu0 0
    %84 = vmatprep.subr.bf16.mxu0 0
    %85 = vmatpush1.bf16.msra.mxu0 0
    %86 = vmatprep.subr.bf16.mxu0 0
    %87 = vmatpush1.bf16.msra.mxu0 0
    %88 = vmatprep.subr.bf16.mxu0 0
    %89 = vmatpush1.bf16.msra.mxu0 0
    %90 = vmatprep.subr.bf16.mxu0 0
    %91 = vmatpush1.bf16.msra.mxu0 0
    %92 = vmatprep.subr.bf16.mxu0 0
    %93 = vmatpush1.bf16.msra.mxu0 0
    %94 = vmatprep.subr.bf16.mxu0 0
    %95 = vmatpush1.bf16.msra.mxu0 0
    %96 = vmatprep.subr.bf16.mxu0 0
    %97 = vmatpush1.bf16.msra.mxu0 0
    %98 = vmatprep.subr.bf16.mxu0 0
    %99 = vmatpush1.bf16.msra.mxu0 0
    %100 = vmatprep.subr.bf16.mxu0 0
    %101 = vmatpush1.bf16.msra.mxu0 0
    %102 = vmatprep.subr.bf16.mxu0 0
    %103 = vmatpush1.bf16.msra.mxu0 0
    %104 = vmatprep.subr.bf16.mxu0 0
    %105 = vmatpush1.bf16.msra.mxu0 0
    %106 = vmatprep.subr.bf16.mxu0 0
    %107 = vmatpush1.bf16.msra.mxu0 0
    %108 = vmatprep.subr.bf16.mxu0 0
    %109 = vmatpush1.bf16.msra.mxu0 0
    %110 = vmatprep.mubr.bf16.mxu0 0
    %111 = vmatmul.mubr.bf16.gmra.mrb[0].mxu0 %v76
    %v112 = vpop.f32.mrb[0].mxu0
    %v113 = vadd.f32 %v55, %v112
    %v114 = vpop.f32.mrb[0].mxu0
    %v115 = vpop.f32.mrb[0].mxu0
    %v116 = vadd.f32 %v55, %v115
    %v117 = vpop.f32.mrb[0].mxu0
    %118 = vdwg.mxu0
    %v119 = vpack.c.bf16 %v116, %v113
    %v121 = vunpack.c.l.b16 %v119
    %v122 = vunpack.c.h.b16 %v119
    %v123 = vpack.c.b16 %v121, %v121
    %v124 = vpack.c.b16 %v122, %v122
    %vm127 = vcmask 257024
    %128 = vst.msk [vmem:[#allocation7] sm:$0xf] %vm127, %v123
    %129 = vst.msk [vmem:[#allocation7 + $0x4] sm:$0xf] %vm127, %v124
    // Predicated region
    $region22: #{tpu_custom_call.1} parent=1 // pred_check
      _
    $region23: #{tpu_custom_call.1} parent=1 // pred_check_branch
      %131 = sbr.rel (0) target = $region25
    $region24: #{tpu_custom_call.1} parent=1 // pred_region
      %s133 = ssub.s32 128, 128
      %134 = vsyncadd [#allocation4], %s133
      %s135 = sshll.u32 [#allocation7], 4
      %s136 = int_to_ptr.vmem [resolvable:$true] %s135
      %141 = dma.vmem_to_hbm [thread:$0]  %s136, 128, %s3, [#allocation4], 64, 64, 4
    $region25: #{tpu_custom_call.1} parent=1 // pred_fallthru
      _
    // Predicated region
    $region26: #{tpu_custom_call.1} parent=1 // pred_check
      _
    $region27: #{tpu_custom_call.1} parent=1 // pred_check_branch
      %143 = sbr.rel (0) target = $region29
    $region28: #{tpu_custom_call.1} parent=1 // pred_region
      %144 = dma.done [#allocation4], 128
    $region29: #{tpu_custom_call.1} parent=1 // pred_fallthru
      _
    %145 = vsyncpa [#allocation3], 1
    %146 = vsyncpa [#allocation6], 1
    %147 = vsyncpa [#allocation4], 1

</llo_original>
